<compile_context>
chip_gen: v7x
topology: tpu7x:2x2x1
jax: 0.10.0
libtpu: 0.0.40
codegen_flags: <defaults>
</compile_context>

<pallas_src>
import math

import jax
import jax.numpy as jnp
from jax.experimental import pallas as pl
from jax.experimental.pallas import tpu as pltpu


def _spe_kernel(x_ref, pe_ref, o_ref):
    # x_ref / pe_ref / o_ref: (r_tile, c_tile) lane-dense VMEM tiles.
    o_ref[...] = x_ref[...] + pe_ref[...]


def _choose_tiles(rows, cols, n_mic, itemsize, target_block_bytes):
    """Pick (r_tile, c_tile) for the (rows, cols) = (B*M, T*D) view."""
    # Row tiles must be a multiple of n_mic (so a single tiled pe slab lines up
    # with every row block) and of the sublane quantum for this dtype.
    sublanes = max(8, 32 // itemsize)            # 8 f32, 16 bf16, 32 int8/fp8
    row_quantum = (n_mic * sublanes) // math.gcd(n_mic, sublanes)

    quantum_bytes = row_quantum * cols * itemsize
    if quantum_bytes <= target_block_bytes:
        # Full-width rows; grow the row tile up to the byte budget.
        r_tile = min(rows, row_quantum * max(1, target_block_bytes // quantum_bytes))
        c_tile = cols
    elif cols % 128 == 0:
        # Rows are very wide: minimal row tile, tile the lane axis in
        # multiples of 128 so stores stay unmasked.
        r_tile = min(rows, row_quantum)
        c_tile = min(cols, max(128, (target_block_bytes // (r_tile * itemsize)) // 128 * 128))
    else:
        # Lane axis not 128-divisible: keep it whole (full-dim blocks are legal).
        r_tile = min(rows, row_quantum)
        c_tile = cols
    return r_tile, c_tile


def spatial_positional_encoding(
    x: jax.Array, pe: jax.Array, *, target_block_bytes: int = 2 * 1024 * 1024
) -> jax.Array:
    """x: (B, M, T, D); pe: (1, M, 1, D).  Returns x + pe (broadcast)."""
    B, M, T, D = x.shape
    assert pe.shape == (1, M, 1, D), pe.shape
    pe = pe.astype(x.dtype)

    rows, cols = B * M, T * D
    itemsize = jnp.dtype(x.dtype).itemsize
    r_tile, c_tile = _choose_tiles(rows, cols, M, itemsize, target_block_bytes)

    # Lane-dense 2-D views.  The reshape is layout-preserving (no transpose).
    x2 = x.reshape(rows, cols)
    # pe broadcast over time, flattened, then tiled to r_tile rows.  Because
    # r_tile % M == 0, row j of every row block needs pe row (j % M), so one
    # small constant slab serves every block.
    pe_rows = jnp.broadcast_to(pe, (1, M, T, D)).reshape(M, cols)
    pe_block = jnp.tile(pe_rows, (r_tile // M, 1))           # (r_tile, cols)

    grid = (pl.cdiv(cols, c_tile), pl.cdiv(rows, r_tile))    # cols outer, rows inner

    out2 = pl.pallas_call(
        _spe_kernel,
        out_shape=jax.ShapeDtypeStruct((rows, cols), x.dtype),
        grid_spec=pltpu.PrefetchScalarGridSpec(
            num_scalar_prefetch=0,
            grid=grid,
            in_specs=[
                pl.BlockSpec((r_tile, c_tile), lambda c, r: (r, c)),
                # pe block index is constant along the inner (row) axis, so it
                # is only re-DMA'd when the column block changes.
                pl.BlockSpec((r_tile, c_tile), lambda c, r: (0, c)),
            ],
            out_specs=pl.BlockSpec((r_tile, c_tile), lambda c, r: (r, c)),
        ),
        # In-place add on the x slab (XLA inserts a copy if x isn't donatable).
        input_output_aliases={0: 0},
        compiler_params=pltpu.CompilerParams(
            dimension_semantics=("parallel", "parallel"),
        ),
    )(x2, pe_block)

    return out2.reshape(B, M, T, D)


if __name__ == "__main__":
    # Small shapes consistent with the module: batch=2, n_mic=4, seq=16, d_model=32.
    B, n_mic, T, d_model = 2, 4, 16, 32

    key = jax.random.PRNGKey(0)
    kx, kpe = jax.random.split(key)

    x = jax.random.normal(kx, (B, n_mic, T, d_model), dtype=jnp.float32)
    # Deterministic init of the module's parameter (torch.randn equivalent in spirit).
    pe = jax.random.normal(kpe, (1, n_mic, 1, d_model), dtype=jnp.float32)

    # Reference computed before the call (the kernel aliases its x slab).
    ref = x + pe

    out = spatial_positional_encoding(x, pe)
    out = jax.block_until_ready(out)

    assert out.shape == x.shape
    assert out.dtype == x.dtype
    assert jnp.allclose(out, ref, atol=1e-6, rtol=1e-6)

    print("KERNEL_OK")
</pallas_src>

<mosaic_0001>
module attributes {stable_mosaic.version = 11 : i64} {
  func.func @_spe_kernel(%arg0: i32, %arg1: i32, %arg2: memref<8x512xf32, #tpu.memory_space<vmem>>, %arg3: memref<8x512xf32, #tpu.memory_space<vmem>>, %arg4: memref<8x512xf32, #tpu.memory_space<vmem>>) attributes {dimension_semantics = [#tpu.dimension_semantics<parallel>, #tpu.dimension_semantics<parallel>], iteration_bounds = array<i64: 1, 1>, scalar_prefetch = 0 : i64, scratch_operands = 0 : i64, tpu.core_type = #tpu.core_type<tc>, window_params = [{transform_indices = @transform_0, window_bounds = array<i64: 8, 512>}, {transform_indices = @transform_1, window_bounds = array<i64: 8, 512>}, {transform_indices = @transform_2, window_bounds = array<i64: 8, 512>}]} {
    %c0 = arith.constant 0 : index
    %c0_0 = arith.constant 0 : index
    %0 = vector.load %arg2[%c0, %c0_0] : memref<8x512xf32, #tpu.memory_space<vmem>>, vector<8x512xf32>
    %c0_1 = arith.constant 0 : index
    %c0_2 = arith.constant 0 : index
    %1 = vector.load %arg3[%c0_1, %c0_2] : memref<8x512xf32, #tpu.memory_space<vmem>>, vector<8x512xf32>
    %2 = arith.addf %0, %1 : vector<8x512xf32>
    %c0_3 = arith.constant 0 : index
    %c0_4 = arith.constant 0 : index
    %3 = vector.load %arg4[%c0_3, %c0_4] : memref<8x512xf32, #tpu.memory_space<vmem>>, vector<8x512xf32>
    tpu.vector_store %arg4[%c0_3, %c0_4], %2 {strides = array<i32>} : memref<8x512xf32, #tpu.memory_space<vmem>>, vector<8x512xf32>,
    return
  }
  func.func @transform_0(%arg0: i32, %arg1: i32) -> (i32, i32) {
    %c0_i32 = arith.constant 0 : i32
    return %arg1, %arg0 : i32, i32
  }
  func.func @transform_1(%arg0: i32, %arg1: i32) -> (i32, i32) {
    %c0_i32 = arith.constant 0 : i32
    %c0_i32_0 = arith.constant 0 : i32
    return %c0_i32, %arg0 : i32, i32
  }
  func.func @transform_2(%arg0: i32, %arg1: i32) -> (i32, i32) {
    %c0_i32 = arith.constant 0 : i32
    return %arg1, %arg0 : i32, i32
  }
}

</mosaic_0001>

<llo_original>
// kernel: tpu_custom_call.1
$region0: #{tpu_custom_call.1}
  #allocation0 [shape = 'u32[]', space=smem, size = 0x4, offset = 0x4, fixed_abs, tag = 'smem constant byte address 0x4 - core index']
  #allocation1 [shape = 'u32[144,128]{1,0:T(1,128)}', space=vmem, size = 0x12000, scoped, tag = 'internal scratch']
  %s0 = inlined_call_operand.hbm [shape: f32[8,512], index: 0, kind: input, shape index: {}, may-alias: {0,2}]
  %s1 = inlined_call_operand.vmem [shape: f32[8,512], index: 1, kind: input, shape index: {}]
  %s2 = inlined_call_operand.hbm [shape: f32[8,512], index: 2, kind: output, shape index: {}, may-alias: {0,2}]
  %s3 = sld [smem:[#allocation0]]
  $region22: #{tpu_custom_call.1} parent=0
    _
  %s5 = ssub.s32 1, %s3
  %s6 = scalar_select 0, %s5, %s3
  $region1: #{tpu_custom_call.1} parent=0
    #allocation2 [shape = 'u8[16384]{0}', space=vmem, size = 0x4000, scoped, tag = 'input window, operand 0, single buffered']
    #allocation3 [shape = 's32[1]{0}', space=sflag, size = 0x4, scoped, tag = 'scoped memory for tpu_custom_call.1']
    #allocation4 [shape = 's32[1]{0}', space=sflag, size = 0x4, scoped, tag = 'scoped memory for tpu_custom_call.1']
    #allocation5 [shape = 'u8[16384]{0}', space=vmem, size = 0x4000, scoped, tag = 'output window, operand 0, single buffered']
    %7 = vsyncpa [#allocation3], 0
    %8 = vsyncpa [#allocation4], 0
    // Predicated region
    $region2: #{tpu_custom_call.1} parent=1 // pred_check
      _
    $region3: #{tpu_custom_call.1} parent=1 // pred_check_branch
      %10 = sbr.rel (0) target = $region5
    $region4: #{tpu_custom_call.1} parent=1 // pred_region
      %s12 = ssub.s32 512, 512
      %13 = vsyncadd [#allocation3], %s12
      %s15 = sshll.u32 [#allocation2], 4
      %s16 = int_to_ptr.vmem [resolvable:$true] %s15
      %18 = dma.hbm_to_vmem [thread:$0]  %s0, 512, %s16, [#allocation3]
    $region5: #{tpu_custom_call.1} parent=1 // pred_fallthru
      _
    // Predicated region
    $region6: #{tpu_custom_call.1} parent=1 // pred_check
      _
    $region7: #{tpu_custom_call.1} parent=1 // pred_check_branch
      %20 = sbr.rel (0) target = $region9
    $region8: #{tpu_custom_call.1} parent=1 // pred_region
      _
    $region9: #{tpu_custom_call.1} parent=1 // pred_fallthru
      _
    // Predicated region
    $region10: #{tpu_custom_call.1} parent=1 // pred_check
      _
    $region11: #{tpu_custom_call.1} parent=1 // pred_check_branch
      %22 = sbr.rel (0) target = $region13
    $region12: #{tpu_custom_call.1} parent=1 // pred_region
      %23 = dma.done [#allocation3], 512
    $region13: #{tpu_custom_call.1} parent=1 // pred_fallthru
      _
    %v24 = vld [vmem:[#allocation2] sm:$0xff]
    %v25 = vld [vmem:[#allocation2 + $0x8] sm:$0xff]
    %v26 = vld [vmem:[#allocation2 + $0x10] sm:$0xff]
    %v27 = vld [vmem:[#allocation2 + $0x18] sm:$0xff]
    %v28 = vld [vmem:[%s1] sm:$0xff]
    %v29 = vld [vmem:[%s1 + $0x8] sm:$0xff]
    %v30 = vld [vmem:[%s1 + $0x10] sm:$0xff]
    %v31 = vld [vmem:[%s1 + $0x18] sm:$0xff]
    %v32 = vadd.f32 %v24, %v28
    %v33 = vadd.f32 %v25, %v29
    %v34 = vadd.f32 %v26, %v30
    %v35 = vadd.f32 %v27, %v31
    %36 = vst [vmem:[#allocation5] sm:$0xff] %v32
    %37 = vst [vmem:[#allocation5 + $0x8] sm:$0xff] %v33
    %38 = vst [vmem:[#allocation5 + $0x10] sm:$0xff] %v34
    %39 = vst [vmem:[#allocation5 + $0x18] sm:$0xff] %v35
    // Predicated region
    $region14: #{tpu_custom_call.1} parent=1 // pred_check
      _
    $region15: #{tpu_custom_call.1} parent=1 // pred_check_branch
      %41 = sbr.rel (0) target = $region17
    $region16: #{tpu_custom_call.1} parent=1 // pred_region
      %s43 = ssub.s32 512, 512
      %44 = vsyncadd [#allocation4], %s43
      %s46 = sshll.u32 [#allocation5], 4
      %s47 = int_to_ptr.vmem [resolvable:$true] %s46
      %49 = dma.vmem_to_hbm [thread:$0]  %s47, 512, %s2, [#allocation4]
    $region17: #{tpu_custom_call.1} parent=1 // pred_fallthru
      _
    // Predicated region
    $region18: #{tpu_custom_call.1} parent=1 // pred_check
      _
    $region19: #{tpu_custom_call.1} parent=1 // pred_check_branch
      %51 = sbr.rel (0) target = $region21
    $region20: #{tpu_custom_call.1} parent=1 // pred_region
      %52 = dma.done [#allocation4], 512
    $region21: #{tpu_custom_call.1} parent=1 // pred_fallthru
      _
    %53 = vsyncpa [#allocation3], 1
    %54 = vsyncpa [#allocation4], 1

</llo_original>
